<compile_context>
chip_gen: v7x
topology: tpu7x:2x2x1
jax: 0.10.0
libtpu: 0.0.40
codegen_flags: <defaults>
</compile_context>

<pallas_src>
import math

import jax
import jax.numpy as jnp
from jax import lax
from jax.experimental import pallas as pl
from jax.experimental.pallas import tpu as pltpu

MOMENTUM = 0.1
EPS = 1e-6


# --------------------------------------------------------------------------- #
# Kernels
# --------------------------------------------------------------------------- #
def _fused_kernel(x_ref, y_ref, stats_ref):
    """Single-pass: full batch axis resident, one wide lane-dense feature tile."""
    x = x_ref[...].astype(jnp.float32)                           # (N, TF)
    mean = jnp.mean(x, axis=0, keepdims=True)                    # (1, TF)
    centered = x - mean                                          # f32 temp (budgeted)
    var = jnp.mean(centered * centered, axis=0, keepdims=True)   # biased variance
    inv_std = lax.rsqrt(var + EPS)                               # EUP, per column
    y_ref[...] = (centered * inv_std).astype(y_ref.dtype)
    stats_ref[0:1, :] = mean.astype(stats_ref.dtype)
    stats_ref[1:2, :] = var.astype(stats_ref.dtype)


def _make_stats_kernel(n_rows, tile_n):
    """Pass 1 of the large-N path: sum / sum-of-squares over batch chunks."""
    def _stats_kernel(x_ref, stats_ref, acc_ref):
        i = pl.program_id(1)                                     # batch chunk (reduction)

        @pl.when(i == 0)
        def _init():
            acc_ref[...] = jnp.zeros_like(acc_ref)

        xb = x_ref[...].astype(jnp.float32)                      # (tile_n, TF)
        row = i * tile_n + lax.broadcasted_iota(jnp.int32, xb.shape, 0)
        xb = jnp.where(row < n_rows, xb, 0.0)                    # mask batch padding
        acc_ref[0:1, :] = acc_ref[0:1, :] + jnp.sum(xb, axis=0, keepdims=True)
        acc_ref[1:2, :] = acc_ref[1:2, :] + jnp.sum(xb * xb, axis=0, keepdims=True)

        @pl.when(i == pl.num_programs(1) - 1)
        def _finalize():
            inv_n = 1.0 / n_rows
            mean = acc_ref[0:1, :] * inv_n
            var = jnp.maximum(acc_ref[1:2, :] * inv_n - mean * mean, 0.0)
            stats_ref[0:1, :] = mean
            stats_ref[1:2, :] = var

    return _stats_kernel


def _normalize_kernel(x_ref, stats_ref, y_ref):
    """Pass 2 of the large-N path: apply the precomputed per-column stats."""
    xb = x_ref[...].astype(jnp.float32)
    mean = stats_ref[0:1, :]
    inv_std = lax.rsqrt(stats_ref[1:2, :] + EPS)
    y_ref[...] = ((xb - mean) * inv_std).astype(y_ref.dtype)


# --------------------------------------------------------------------------- #
# Tile sizing (byte-targeted, generation aware)
# --------------------------------------------------------------------------- #
def _vmem_capacity_bytes():
    try:
        return int(pltpu.get_tpu_info().vmem_capacity_bytes)
    except Exception:
        return 64 << 20  # conservative fallback (v7x per-core VMEM)


def _pick_tile_f(n, f, xsz, vmem_budget_bytes):
    """Lane-tile for the single-pass kernel; None => use the two-pass path."""
    candidates = [t for t in range(128, f + 1, 128) if f % t == 0]
    if not candidates:
        candidates = [f]  # tiny / non-128-multiple F: single full-extent block

    def block_bytes(t):
        # double-buffered x and y blocks, f32 upcast + `centered` temp,
        # double-buffered (2, t) stats, small per-column vectors.
        return (2 * n * t * xsz + 2 * n * t * xsz
                + 2 * n * t * 4
                + 2 * 2 * t * 4
                + 4 * t * 4)

    fitting = [t for t in candidates if block_bytes(t) <= vmem_budget_bytes]
    if not fitting:
        return None

    target = 2 << 20  # ~2 MiB of input per block: on the measured roofline plateau
    big = [t for t in fitting if n * t * xsz >= target]
    if big:
        tile = min(big)          # smallest block that reaches target -> most grid steps
    else:
        tile = max(fitting)      # rows are small: go as wide as possible (fewer DMAs)

    # v7x: prefer >=4 grid steps (>=2 per TensorCore) if blocks stay >= ~1 MiB.
    if f // tile < 4:
        alt = [t for t in fitting if f // t >= 4 and n * t * xsz >= (1 << 20)]
        if alt:
            tile = max(alt)
    return tile


def _pick_two_pass_tiles(n, f, xsz, vmem_budget_bytes):
    """(tile_n, tile_f) for the large-N two-pass path."""
    f_cands = [t for t in range(128, min(f, 2048) + 1, 128) if f % t == 0]
    tile_f = max(f_cands) if f_cands else f

    def block_bytes(tn):
        # normalize pass is the heavier one: double-buffered x and y + upcast + stats
        return 4 * tn * tile_f * xsz + tn * tile_f * 4 + 4 * 2 * tile_f * 4

    tile_n = 8
    while (tile_n * 2 <= n
           and block_bytes(tile_n * 2) <= vmem_budget_bytes
           and tile_n * tile_f * xsz < (2 << 20)):
        tile_n *= 2
    return tile_n, tile_f


# --------------------------------------------------------------------------- #
# Forward
# --------------------------------------------------------------------------- #
def _two_pass_forward(x2, n, f, vmem_limit, budget):
    tile_n, tile_f = _pick_two_pass_tiles(n, f, x2.dtype.itemsize, budget)
    grid_f = f // tile_f
    n_steps = pl.cdiv(n, tile_n)

    stats = pl.pallas_call(
        _make_stats_kernel(n, tile_n),
        out_shape=jax.ShapeDtypeStruct((2, f), jnp.float32),
        grid_spec=pl.GridSpec(
            grid=(grid_f, n_steps),
            in_specs=[pl.BlockSpec((tile_n, tile_f), lambda j, i: (i, j))],
            out_specs=pl.BlockSpec((2, tile_f), lambda j, i: (0, j)),
        ),
        scratch_shapes=[pltpu.VMEM((2, tile_f), jnp.float32)],
        compiler_params=pltpu.CompilerParams(
            dimension_semantics=("parallel", "arbitrary"),
            vmem_limit_bytes=vmem_limit),
    )(x2)

    y2 = pl.pallas_call(
        _normalize_kernel,
        out_shape=jax.ShapeDtypeStruct((n, f), x2.dtype),
        grid_spec=pl.GridSpec(
            grid=(grid_f, n_steps),
            in_specs=[pl.BlockSpec((tile_n, tile_f), lambda j, i: (i, j)),
                      pl.BlockSpec((2, tile_f), lambda j, i: (0, j))],
            out_specs=pl.BlockSpec((tile_n, tile_f), lambda j, i: (i, j)),
        ),
        input_output_aliases={0: 0},
        compiler_params=pltpu.CompilerParams(
            dimension_semantics=("parallel", "parallel"),
            vmem_limit_bytes=vmem_limit),
    )(x2, stats)
    return y2, stats


@jax.jit
def data_normalization_forward(x, running_mean, running_var):
    """x: (N, C, H, W). Returns (y, new_running_mean, new_running_var)."""
    n = x.shape[0]
    f = math.prod(x.shape[1:])
    x2 = x.reshape(n, f)

    cap = _vmem_capacity_bytes()
    vmem_limit = max(32 << 20, min(int(cap * 0.9), 100 << 20))
    budget = (vmem_limit * 3) // 4          # headroom for compiler-internal scratch

    tile_f = _pick_tile_f(n, f, x2.dtype.itemsize, budget)
    if tile_f is not None:
        y2, stats = pl.pallas_call(
            _fused_kernel,
            out_shape=(jax.ShapeDtypeStruct((n, f), x.dtype),
                       jax.ShapeDtypeStruct((2, f), jnp.float32)),
            grid_spec=pl.GridSpec(
                grid=(f // tile_f,),
                in_specs=[pl.BlockSpec((n, tile_f), lambda j: (0, j))],
                out_specs=(pl.BlockSpec((n, tile_f), lambda j: (0, j)),
                           pl.BlockSpec((2, tile_f), lambda j: (0, j))),
            ),
            input_output_aliases={0: 0},          # y reuses x's HBM buffer
            compiler_params=pltpu.CompilerParams(
                dimension_semantics=("parallel",),
                vmem_limit_bytes=vmem_limit),
        )(x2)
    else:
        # Batch too large for a full-N block: bounded-tile accumulator path.
        y2, stats = _two_pass_forward(x2, n, f, vmem_limit, budget)

    stat_shape = (1,) + x.shape[1:]
    batch_mean = stats[0].reshape(stat_shape)
    batch_var = stats[1].reshape(stat_shape)
    y = y2.reshape(x.shape)

    # Buffer EMA update (plain-JAX glue; scalar buffers broadcast to keepdim
    # batch-stat shape exactly as the PyTorch module reassigns them).
    # TODO(synk): eval-mode branch (normalize with running stats) not implemented.
    new_running_mean = (1.0 - MOMENTUM) * running_mean + MOMENTUM * batch_mean
    new_running_var = (1.0 - MOMENTUM) * running_var + MOMENTUM * batch_var
    return y, new_running_mean, new_running_var


if __name__ == "__main__":
    key = jax.random.PRNGKey(0)
    x = jax.random.normal(key, (2, 4, 16, 16), dtype=jnp.float32)

    # Buffers as in __init__: scalar 0.0 / 1.0.
    running_mean = jnp.asarray(0.0, dtype=jnp.float32)
    running_var = jnp.asarray(1.0, dtype=jnp.float32)

    y, rm, rv = data_normalization_forward(x, running_mean, running_var)
    jax.block_until_ready((y, rm, rv))

    # Pure-JAX reference.
    bm = jnp.mean(x, axis=0, keepdims=True)
    bv = jnp.mean((x - bm) ** 2, axis=0, keepdims=True)
    y_ref = (x - bm) / jnp.sqrt(bv + EPS)
    assert jnp.allclose(y, y_ref, atol=1e-5, rtol=1e-5)
    assert jnp.allclose(rm, 0.9 * 0.0 + 0.1 * bm, atol=1e-6)
    assert jnp.allclose(rv, 0.9 * 1.0 + 0.1 * bv, atol=1e-6)

    print("KERNEL_OK")
</pallas_src>

<mosaic_0001>
module attributes {stable_mosaic.version = 11 : i64} {
  func.func @_fused_kernel(%arg0: i32, %arg1: memref<2x1024xf32, #tpu.memory_space<vmem>>, %arg2: memref<2x1024xf32, #tpu.memory_space<vmem>>, %arg3: memref<2x1024xf32, #tpu.memory_space<vmem>>) attributes {dimension_semantics = [#tpu.dimension_semantics<parallel>], iteration_bounds = array<i64: 1>, scalar_prefetch = 0 : i64, scratch_operands = 0 : i64, tpu.core_type = #tpu.core_type<tc>, window_params = [{transform_indices = @transform_0, window_bounds = array<i64: 2, 1024>}, {transform_indices = @transform_1, window_bounds = array<i64: 2, 1024>}, {transform_indices = @transform_2, window_bounds = array<i64: 2, 1024>}]} {
    %c0 = arith.constant 0 : index
    %c0_0 = arith.constant 0 : index
    %0 = vector.load %arg1[%c0, %c0_0] : memref<2x1024xf32, #tpu.memory_space<vmem>>, vector<2x1024xf32>
    %cst = arith.constant dense<0.000000e+00> : vector<1024xf32>
    %1 = vector.multi_reduction <add>, %0, %cst [0] : vector<2x1024xf32> to vector<1024xf32>
    %2 = vector.shape_cast %1 : vector<1024xf32> to vector<1x1024xf32>
    %cst_1 = arith.constant 2.000000e+00 : f32
    %3 = vector.broadcast %cst_1 : f32 to vector<1x1024xf32>
    %4 = arith.divf %2, %3 : vector<1x1024xf32>
    %5 = vector.broadcast %4 : vector<1x1024xf32> to vector<2x1024xf32>
    %6 = arith.subf %0, %5 : vector<2x1024xf32>
    %7 = arith.mulf %6, %6 : vector<2x1024xf32>
    %cst_2 = arith.constant dense<0.000000e+00> : vector<1024xf32>
    %8 = vector.multi_reduction <add>, %7, %cst_2 [0] : vector<2x1024xf32> to vector<1024xf32>
    %9 = vector.shape_cast %8 : vector<1024xf32> to vector<1x1024xf32>
    %cst_3 = arith.constant 2.000000e+00 : f32
    %10 = vector.broadcast %cst_3 : f32 to vector<1x1024xf32>
    %11 = arith.divf %9, %10 : vector<1x1024xf32>
    %cst_4 = arith.constant 9.99999997E-7 : f32
    %12 = vector.broadcast %cst_4 : f32 to vector<1x1024xf32>
    %13 = arith.addf %11, %12 : vector<1x1024xf32>
    %14 = math.rsqrt %13 : vector<1x1024xf32>
    %15 = vector.broadcast %14 : vector<1x1024xf32> to vector<2x1024xf32>
    %16 = arith.mulf %6, %15 : vector<2x1024xf32>
    %c0_5 = arith.constant 0 : index
    %c0_6 = arith.constant 0 : index
    %17 = vector.load %arg2[%c0_5, %c0_6] : memref<2x1024xf32, #tpu.memory_space<vmem>>, vector<2x1024xf32>
    tpu.vector_store %arg2[%c0_5, %c0_6], %16 {strides = array<i32>} : memref<2x1024xf32, #tpu.memory_space<vmem>>, vector<2x1024xf32>,
    %c0_7 = arith.constant 0 : index
    %c0_8 = arith.constant 0 : index
    %18 = vector.load %arg3[%c0_7, %c0_8] : memref<2x1024xf32, #tpu.memory_space<vmem>>, vector<1x1024xf32>
    tpu.vector_store %arg3[%c0_7, %c0_8], %4 {strides = array<i32>} : memref<2x1024xf32, #tpu.memory_space<vmem>>, vector<1x1024xf32>,
    %c1 = arith.constant 1 : index
    %c0_9 = arith.constant 0 : index
    %19 = vector.load %arg3[%c1, %c0_9] : memref<2x1024xf32, #tpu.memory_space<vmem>>, vector<1x1024xf32>
    tpu.vector_store %arg3[%c1, %c0_9], %11 {strides = array<i32>} : memref<2x1024xf32, #tpu.memory_space<vmem>>, vector<1x1024xf32>,
    return
  }
  func.func @transform_0(%arg0: i32) -> (i32, i32) {
    %c0_i32 = arith.constant 0 : i32
    %c0_i32_0 = arith.constant 0 : i32
    return %c0_i32, %arg0 : i32, i32
  }
  func.func @transform_1(%arg0: i32) -> (i32, i32) {
    %c0_i32 = arith.constant 0 : i32
    %c0_i32_0 = arith.constant 0 : i32
    return %c0_i32, %arg0 : i32, i32
  }
  func.func @transform_2(%arg0: i32) -> (i32, i32) {
    %c0_i32 = arith.constant 0 : i32
    %c0_i32_0 = arith.constant 0 : i32
    return %c0_i32, %arg0 : i32, i32
  }
}

</mosaic_0001>

<llo_original>
// kernel: data_normalization_forward.1
$region0: #{data_normalization_forward.1}
  #allocation0 [shape = 'u32[]', space=smem, size = 0x4, offset = 0x4, fixed_abs, tag = 'smem constant byte address 0x4 - core index']
  #allocation1 [shape = 'u32[144,128]{1,0:T(1,128)}', space=vmem, size = 0x12000, scoped, tag = 'internal scratch']
  %s0 = inlined_call_operand.vmem [shape: f32[2,1024], index: 0, kind: input, shape index: {}, may-alias: {0,1}]
  %s1 = inlined_call_operand.vmem [shape: f32[2,1024], index: 1, kind: output, shape index: {0}, may-alias: {0,1}]
  %s2 = inlined_call_operand.vmem [shape: f32[2,1024], index: 2, kind: output, shape index: {1}]
  %3 = xla_tuple %s1, %s2
  %s4 = sld [smem:[#allocation0]]
  $region22: #{data_normalization_forward.1} parent=0
    _
  %s6 = ssub.s32 1, %s4
  %s7 = scalar_select 0, %s6, %s4
  // Predicated region
  $region2: #{data_normalization_forward.1} parent=0 // pred_check
    _
  $region3: #{data_normalization_forward.1} parent=0 // pred_check_branch
    %9 = sbr.rel (0) target = $region5
  $region4: #{data_normalization_forward.1} parent=0 // pred_region
    _
  $region5: #{data_normalization_forward.1} parent=0 // pred_fallthru
    _
  %v10 = vld [vmem:[%s0] sm:$0xff]
  %v11 = vld [vmem:[%s0 + $0x8] sm:$0xff]
  %v14 = vcombine.high %v10, %v10
  %v16 = vunpack.c.l.s4 1983009808
  %v17 = vunpack.c.0.s8 %v16
  %v18 = vlaneseq
  %v19 = vshrl.u32 %v18, 7
  %v20 = vsub.s32 %v17, %v19
  %v21 = vrot.slane %v10, %v20
  %v23 = vunpack.c.l.s4 1983009808
  %v24 = vunpack.c.0.s8 %v23
  %v25 = vlaneseq
  %v26 = vshrl.u32 %v25, 7
  %v27 = vsub.s32 %v24, %v26
  %v28 = vrot.slane %v14, %v27
  %v29 = vcombine.high %v21, %v21
  %v30 = vcombine.high %v28, %v28
  %v31 = vcombine.high %v11, %v11
  %v33 = vunpack.c.l.s4 1983009808
  %v34 = vunpack.c.0.s8 %v33
  %v35 = vlaneseq
  %v36 = vshrl.u32 %v35, 7
  %v37 = vsub.s32 %v34, %v36
  %v38 = vrot.slane %v11, %v37
  %v40 = vunpack.c.l.s4 1983009808
  %v41 = vunpack.c.0.s8 %v40
  %v42 = vlaneseq
  %v43 = vshrl.u32 %v42, 7
  %v44 = vsub.s32 %v41, %v43
  %v45 = vrot.slane %v31, %v44
  %v46 = vcombine.high %v38, %v38
  %v47 = vcombine.high %v45, %v45
  %vm56 = vcmask 1041408
  %v57 = vsel %vm56, %v21, 0.0
  %v58 = vrot.slane %v57, 4
  %v59 = vadd.f32 %v57, %v58
  %v60 = vrot.slane %v59, 2
  %v61 = vadd.f32 %v59, %v60
  %v62 = vrot.slane %v61, 1
  %v63 = vadd.f32 %v61, %v62
  %v64 = vsel %vm56, %v29, 0.0
  %v65 = vrot.slane %v64, 4
  %v66 = vadd.f32 %v64, %v65
  %v67 = vrot.slane %v66, 2
  %v68 = vadd.f32 %v66, %v67
  %v69 = vrot.slane %v68, 1
  %v70 = vadd.f32 %v68, %v69
  %v71 = vsel %vm56, %v28, 0.0
  %v72 = vrot.slane %v71, 4
  %v73 = vadd.f32 %v71, %v72
  %v74 = vrot.slane %v73, 2
  %v75 = vadd.f32 %v73, %v74
  %v76 = vrot.slane %v75, 1
  %v77 = vadd.f32 %v75, %v76
  %v78 = vsel %vm56, %v30, 0.0
  %v79 = vrot.slane %v78, 4
  %v80 = vadd.f32 %v78, %v79
  %v81 = vrot.slane %v80, 2
  %v82 = vadd.f32 %v80, %v81
  %v83 = vrot.slane %v82, 1
  %v84 = vadd.f32 %v82, %v83
  %v85 = vsel %vm56, %v38, 0.0
  %v86 = vrot.slane %v85, 4
  %v87 = vadd.f32 %v85, %v86
  %v88 = vrot.slane %v87, 2
  %v89 = vadd.f32 %v87, %v88
  %v90 = vrot.slane %v89, 1
  %v91 = vadd.f32 %v89, %v90
  %v92 = vsel %vm56, %v46, 0.0
  %v93 = vrot.slane %v92, 4
  %v94 = vadd.f32 %v92, %v93
  %v95 = vrot.slane %v94, 2
  %v96 = vadd.f32 %v94, %v95
  %v97 = vrot.slane %v96, 1
  %v98 = vadd.f32 %v96, %v97
  %v99 = vsel %vm56, %v45, 0.0
  %v100 = vrot.slane %v99, 4
  %v101 = vadd.f32 %v99, %v100
  %v102 = vrot.slane %v101, 2
  %v103 = vadd.f32 %v101, %v102
  %v104 = vrot.slane %v103, 1
  %v105 = vadd.f32 %v103, %v104
  %v106 = vsel %vm56, %v47, 0.0
  %v107 = vrot.slane %v106, 4
  %v108 = vadd.f32 %v106, %v107
  %v109 = vrot.slane %v108, 2
  %v110 = vadd.f32 %v108, %v109
  %v111 = vrot.slane %v110, 1
  %v112 = vadd.f32 %v110, %v111
  %v113 = vrcp.pop 2.0
  %v114 = vmul.f32 %v63, %v113
  %v115 = vmul.f32 %v70, %v113
  %v116 = vmul.f32 %v77, %v113
  %v117 = vmul.f32 %v84, %v113
  %v118 = vmul.f32 %v91, %v113
  %v119 = vmul.f32 %v98, %v113
  %v120 = vmul.f32 %v105, %v113
  %v121 = vmul.f32 %v112, %v113
  %v130 = vcombine.low %v114, %v115
  %v131 = vcombine.low %v116, %v117
  %v133 = vunpack.c.l.s4 1983009808
  %v134 = vunpack.c.0.s8 %v133
  %v135 = vlaneseq
  %v136 = vshrl.u32 %v135, 7
  %v137 = vsub.s32 %v134, %v136
  %v138 = vrot.slane %v130, %v137
  %v140 = vunpack.c.l.s4 1983009808
  %v141 = vunpack.c.0.s8 %v140
  %v142 = vlaneseq
  %v143 = vshrl.u32 %v142, 7
  %v144 = vsub.s32 %v141, %v143
  %v145 = vrot.slane %v131, %v144
  %v146 = vcombine.low %v138, %v145
  %v147 = vcombine.low %v118, %v119
  %v148 = vcombine.low %v120, %v121
  %v150 = vunpack.c.l.s4 1983009808
  %v151 = vunpack.c.0.s8 %v150
  %v152 = vlaneseq
  %v153 = vshrl.u32 %v152, 7
  %v154 = vsub.s32 %v151, %v153
  %v155 = vrot.slane %v147, %v154
  %v157 = vunpack.c.l.s4 1983009808
  %v158 = vunpack.c.0.s8 %v157
  %v159 = vlaneseq
  %v160 = vshrl.u32 %v159, 7
  %v161 = vsub.s32 %v158, %v160
  %v162 = vrot.slane %v148, %v161
  %v163 = vcombine.low %v155, %v162
  %v166 = vsub.f32 %v10, %v146
  %v167 = vsub.f32 %v11, %v163
  %v168 = vmul.f32 %v166, %v166
  %v169 = vmul.f32 %v167, %v167
  %v172 = vcombine.high %v168, %v168
  %v174 = vunpack.c.l.s4 1983009808
  %v175 = vunpack.c.0.s8 %v174
  %v176 = vlaneseq
  %v177 = vshrl.u32 %v176, 7
  %v178 = vsub.s32 %v175, %v177
  %v179 = vrot.slane %v168, %v178
  %v181 = vunpack.c.l.s4 1983009808
  %v182 = vunpack.c.0.s8 %v181
  %v183 = vlaneseq
  %v184 = vshrl.u32 %v183, 7
  %v185 = vsub.s32 %v182, %v184
  %v186 = vrot.slane %v172, %v185
  %v187 = vcombine.high %v179, %v179
  %v188 = vcombine.high %v186, %v186
  %v189 = vcombine.high %v169, %v169
  %v191 = vunpack.c.l.s4 1983009808
  %v192 = vunpack.c.0.s8 %v191
  %v193 = vlaneseq
  %v194 = vshrl.u32 %v193, 7
  %v195 = vsub.s32 %v192, %v194
  %v196 = vrot.slane %v169, %v195
  %v198 = vunpack.c.l.s4 1983009808
  %v199 = vunpack.c.0.s8 %v198
  %v200 = vlaneseq
  %v201 = vshrl.u32 %v200, 7
  %v202 = vsub.s32 %v199, %v201
  %v203 = vrot.slane %v189, %v202
  %v204 = vcombine.high %v196, %v196
  %v205 = vcombine.high %v203, %v203
  %v214 = vsel %vm56, %v179, 0.0
  %v215 = vrot.slane %v214, 4
  %v216 = vadd.f32 %v214, %v215
  %v217 = vrot.slane %v216, 2
  %v218 = vadd.f32 %v216, %v217
  %v219 = vrot.slane %v218, 1
  %v220 = vadd.f32 %v218, %v219
  %v221 = vsel %vm56, %v187, 0.0
  %v222 = vrot.slane %v221, 4
  %v223 = vadd.f32 %v221, %v222
  %v224 = vrot.slane %v223, 2
  %v225 = vadd.f32 %v223, %v224
  %v226 = vrot.slane %v225, 1
  %v227 = vadd.f32 %v225, %v226
  %v228 = vsel %vm56, %v186, 0.0
  %v229 = vrot.slane %v228, 4
  %v230 = vadd.f32 %v228, %v229
  %v231 = vrot.slane %v230, 2
  %v232 = vadd.f32 %v230, %v231
  %v233 = vrot.slane %v232, 1
  %v234 = vadd.f32 %v232, %v233
  %v235 = vsel %vm56, %v188, 0.0
  %v236 = vrot.slane %v235, 4
  %v237 = vadd.f32 %v235, %v236
  %v238 = vrot.slane %v237, 2
  %v239 = vadd.f32 %v237, %v238
  %v240 = vrot.slane %v239, 1
  %v241 = vadd.f32 %v239, %v240
  %v242 = vsel %vm56, %v196, 0.0
  %v243 = vrot.slane %v242, 4
  %v244 = vadd.f32 %v242, %v243
  %v245 = vrot.slane %v244, 2
  %v246 = vadd.f32 %v244, %v245
  %v247 = vrot.slane %v246, 1
  %v248 = vadd.f32 %v246, %v247
  %v249 = vsel %vm56, %v204, 0.0
  %v250 = vrot.slane %v249, 4
  %v251 = vadd.f32 %v249, %v250
  %v252 = vrot.slane %v251, 2
  %v253 = vadd.f32 %v251, %v252
  %v254 = vrot.slane %v253, 1
  %v255 = vadd.f32 %v253, %v254
  %v256 = vsel %vm56, %v203, 0.0
  %v257 = vrot.slane %v256, 4
  %v258 = vadd.f32 %v256, %v257
  %v259 = vrot.slane %v258, 2
  %v260 = vadd.f32 %v258, %v259
  %v261 = vrot.slane %v260, 1
  %v262 = vadd.f32 %v260, %v261
  %v263 = vsel %vm56, %v205, 0.0
  %v264 = vrot.slane %v263, 4
  %v265 = vadd.f32 %v263, %v264
  %v266 = vrot.slane %v265, 2
  %v267 = vadd.f32 %v265, %v266
  %v268 = vrot.slane %v267, 1
  %v269 = vadd.f32 %v267, %v268
  %v270 = vmul.f32 %v220, %v113
  %v271 = vmul.f32 %v227, %v113
  %v272 = vmul.f32 %v234, %v113
  %v273 = vmul.f32 %v241, %v113
  %v274 = vmul.f32 %v248, %v113
  %v275 = vmul.f32 %v255, %v113
  %v276 = vmul.f32 %v262, %v113
  %v277 = vmul.f32 %v269, %v113
  %v278 = vadd.f32 %v270, 1e-06
  %v279 = vadd.f32 %v271, 1e-06
  %v280 = vadd.f32 %v272, 1e-06
  %v281 = vadd.f32 %v273, 1e-06
  %v282 = vadd.f32 %v274, 1e-06
  %v283 = vadd.f32 %v275, 1e-06
  %v284 = vadd.f32 %v276, 1e-06
  %v285 = vadd.f32 %v277, 1e-06
  %v286 = vrsqrt.pop %v278
  %v287 = vrsqrt.pop %v279
  %v288 = vrsqrt.pop %v280
  %v289 = vrsqrt.pop %v281
  %v290 = vrsqrt.pop %v282
  %v291 = vrsqrt.pop %v283
  %v292 = vrsqrt.pop %v284
  %v293 = vrsqrt.pop %v285
  %v302 = vcombine.low %v286, %v287
  %v303 = vcombine.low %v288, %v289
  %v305 = vunpack.c.l.s4 1983009808
  %v306 = vunpack.c.0.s8 %v305
  %v307 = vlaneseq
  %v308 = vshrl.u32 %v307, 7
  %v309 = vsub.s32 %v306, %v308
  %v310 = vrot.slane %v302, %v309
  %v312 = vunpack.c.l.s4 1983009808
  %v313 = vunpack.c.0.s8 %v312
  %v314 = vlaneseq
  %v315 = vshrl.u32 %v314, 7
  %v316 = vsub.s32 %v313, %v315
  %v317 = vrot.slane %v303, %v316
  %v318 = vcombine.low %v310, %v317
  %v319 = vcombine.low %v290, %v291
  %v320 = vcombine.low %v292, %v293
  %v322 = vunpack.c.l.s4 1983009808
  %v323 = vunpack.c.0.s8 %v322
  %v324 = vlaneseq
  %v325 = vshrl.u32 %v324, 7
  %v326 = vsub.s32 %v323, %v325
  %v327 = vrot.slane %v319, %v326
  %v329 = vunpack.c.l.s4 1983009808
  %v330 = vunpack.c.0.s8 %v329
  %v331 = vlaneseq
  %v332 = vshrl.u32 %v331, 7
  %v333 = vsub.s32 %v330, %v332
  %v334 = vrot.slane %v320, %v333
  %v335 = vcombine.low %v327, %v334
  %v338 = vmul.f32 %v166, %v318
  %v339 = vmul.f32 %v167, %v335
  %340 = vst [vmem:[%s1] sm:$0xff] %v338
  %341 = vst [vmem:[%s1 + $0x8] sm:$0xff] %v339
  %v343 = vunpack.c.l.s4 1966171168
  %v344 = vunpack.c.0.s8 %v343
  %v345 = vlaneseq
  %v346 = vshrl.u32 %v345, 7
  %v347 = vsub.s32 %v344, %v346
  %v348 = vrot.slane %v130, %v347
  %v350 = vunpack.c.l.s4 1966171168
  %v351 = vunpack.c.0.s8 %v350
  %v352 = vlaneseq
  %v353 = vshrl.u32 %v352, 7
  %v354 = vsub.s32 %v351, %v353
  %v355 = vrot.slane %v131, %v354
  %v357 = vunpack.c.l.s4 1966171168
  %v358 = vunpack.c.0.s8 %v357
  %v359 = vlaneseq
  %v360 = vshrl.u32 %v359, 7
  %v361 = vsub.s32 %v358, %v360
  %v362 = vrot.slane %v147, %v361
  %v364 = vunpack.c.l.s4 1966171168
  %v365 = vunpack.c.0.s8 %v364
  %v366 = vlaneseq
  %v367 = vshrl.u32 %v366, 7
  %v368 = vsub.s32 %v365, %v367
  %v369 = vrot.slane %v148, %v368
  %v370 = vcombine.low %v348, %v355
  %v371 = vcombine.low %v362, %v369
  %v373 = vunpack.c.l.s4 1966171168
  %v374 = vunpack.c.0.s8 %v373
  %v375 = vlaneseq
  %v376 = vshrl.u32 %v375, 7
  %v377 = vsub.s32 %v374, %v376
  %v378 = vrot.slane %v370, %v377
  %v380 = vunpack.c.l.s4 1966171168
  %v381 = vunpack.c.0.s8 %v380
  %v382 = vlaneseq
  %v383 = vshrl.u32 %v382, 7
  %v384 = vsub.s32 %v381, %v383
  %v385 = vrot.slane %v371, %v384
  %v386 = vcombine.low %v378, %v385
  %388 = vst [vmem:[%s2] ss:$2 sm:$0xff] %v386
  %v397 = vcombine.low %v270, %v271
  %v398 = vcombine.low %v272, %v273
  %v399 = vcombine.low %v274, %v275
  %v400 = vcombine.low %v276, %v277
  %v402 = vunpack.c.l.s4 1966171168
  %v403 = vunpack.c.0.s8 %v402
  %v404 = vlaneseq
  %v405 = vshrl.u32 %v404, 7
  %v406 = vsub.s32 %v403, %v405
  %v407 = vrot.slane %v397, %v406
  %v409 = vunpack.c.l.s4 1966171168
  %v410 = vunpack.c.0.s8 %v409
  %v411 = vlaneseq
  %v412 = vshrl.u32 %v411, 7
  %v413 = vsub.s32 %v410, %v412
  %v414 = vrot.slane %v398, %v413
  %v416 = vunpack.c.l.s4 1966171168
  %v417 = vunpack.c.0.s8 %v416
  %v418 = vlaneseq
  %v419 = vshrl.u32 %v418, 7
  %v420 = vsub.s32 %v417, %v419
  %v421 = vrot.slane %v399, %v420
  %v423 = vunpack.c.l.s4 1966171168
  %v424 = vunpack.c.0.s8 %v423
  %v425 = vlaneseq
  %v426 = vshrl.u32 %v425, 7
  %v427 = vsub.s32 %v424, %v426
  %v428 = vrot.slane %v400, %v427
  %v429 = vcombine.low %v407, %v414
  %v430 = vcombine.low %v421, %v428
  %v432 = vunpack.c.l.s4 1966171168
  %v433 = vunpack.c.0.s8 %v432
  %v434 = vlaneseq
  %v435 = vshrl.u32 %v434, 7
  %v436 = vsub.s32 %v433, %v435
  %v437 = vrot.slane %v429, %v436
  %v439 = vunpack.c.l.s4 1966171168
  %v440 = vunpack.c.0.s8 %v439
  %v441 = vlaneseq
  %v442 = vshrl.u32 %v441, 7
  %v443 = vsub.s32 %v440, %v442
  %v444 = vrot.slane %v430, %v443
  %v445 = vcombine.low %v437, %v444
  %s447 = scalar_lea.vmem %s2, 1
  %448 = vst [vmem:[%s447] ss:$2 sm:$0xff] %v445
  // Predicated region
  $region6: #{data_normalization_forward.1} parent=0 // pred_check
    _
  $region7: #{data_normalization_forward.1} parent=0 // pred_check_branch
    %450 = sbr.rel (0) target = $region9
  $region8: #{data_normalization_forward.1} parent=0 // pred_region
    _
  $region9: #{data_normalization_forward.1} parent=0 // pred_fallthru
    _
  // Predicated region
  $region10: #{data_normalization_forward.1} parent=0 // pred_check
    _
  $region11: #{data_normalization_forward.1} parent=0 // pred_check_branch
    %452 = sbr.rel (0) target = $region13
  $region12: #{data_normalization_forward.1} parent=0 // pred_region
    _
  $region13: #{data_normalization_forward.1} parent=0 // pred_fallthru
    _
  // Predicated region
  $region14: #{data_normalization_forward.1} parent=0 // pred_check
    _
  $region15: #{data_normalization_forward.1} parent=0 // pred_check_branch
    %454 = sbr.rel (0) target = $region17
  $region16: #{data_normalization_forward.1} parent=0 // pred_region
    _
  $region17: #{data_normalization_forward.1} parent=0 // pred_fallthru
    _
  // Predicated region
  $region18: #{data_normalization_forward.1} parent=0 // pred_check
    _
  $region19: #{data_normalization_forward.1} parent=0 // pred_check_branch
    %456 = sbr.rel (0) target = $region21
  $region20: #{data_normalization_forward.1} parent=0 // pred_region
    _
  $region21: #{data_normalization_forward.1} parent=0 // pred_fallthru
    _

</llo_original>
